<compile_context>
chip_gen: v7x
topology: tpu7x:2x2x1
jax: 0.10.0
libtpu: 0.0.40
codegen_flags: <defaults>
</compile_context>

<pallas_src>
import jax
import jax.numpy as jnp
from jax.experimental import pallas as pl
from jax.experimental.pallas import tpu as pltpu

C_IN, C_OUT, K, STRIDE, PAD = 2, 2, 4, 16, 1
_ROWS = C_IN * K          # 8 im2col rows -> exactly one sublane group
_LANE = 128               # lane width
_TL_MAX = 65536           # lane-block size; ~5 MiB double-buffered VMEM


def conv1d_kernel(x_ref, w_ref, b_ref, o_ref):
    """Strided Conv1d as one tiny MXU matmul per lane-dense block.

    x_ref: (C_IN*K, TL)   f32 VMEM  im2col block, rows ordered (c, k).
    w_ref: (C_OUT, C_IN*K) f32 VMEM weight tile.
    b_ref: (C_OUT, 1)      f32 VMEM bias.
    o_ref: (C_OUT, TL)     f32 VMEM lane-dense output block.
    """
    o_ref[...] = jnp.dot(w_ref[...], x_ref[...],
                         preferred_element_type=jnp.float32) + b_ref[...]


def embed_forward(x, w, b):
    """x: (N, C_IN, L) f32; w: (C_OUT, C_IN, K) f32; b: (C_OUT,) f32."""
    x = x.astype(jnp.float32)
    w = w.astype(jnp.float32)
    b = b.astype(jnp.float32)
    n, c_in, length = x.shape
    assert c_in == C_IN
    assert STRIDE >= K  # required for the reshape-based patch extraction
    l_out = (length + 2 * PAD - K) // STRIDE + 1

    # Block the (lane-aligned) output-length axis.
    l_aligned = pl.cdiv(l_out, _LANE) * _LANE
    tl = min(_TL_MAX, l_aligned)
    if n == 1 and tl == l_aligned and l_aligned >= 2 * _LANE:
        # v7x: keep >= 2 grid blocks total so both TensorCores get work.
        tl = (l_aligned // 2 // _LANE) * _LANE
    t_pad = pl.cdiv(l_aligned, tl) * tl          # padded output length

    # One lax.pad does the conv left-pad, the right pad/truncation and the
    # lane/block padding in a single HBM pass (negative high-pad truncates;
    # truncated / zero-padded columns are never read by a valid window).
    total = t_pad * STRIDE
    x_pad = jax.lax.pad(
        x, jnp.array(0, x.dtype),
        ((0, 0, 0), (0, 0, 0), (PAD, total - length - PAD, 0)))

    # Batch-major im2col: keep only the K used taps of every stride-16 window
    # (drops 12/16 of the HBM traffic) and put the output-length axis on
    # lanes.  Only the small trailing (T, K) dims are transposed.
    patches = x_pad.reshape(n, C_IN, t_pad, STRIDE)[..., :K]     # (N,Cin,T,K)
    x2 = patches.transpose(0, 1, 3, 2).reshape(n, _ROWS, t_pad)  # (N, 8, T)

    w2 = w.reshape(C_OUT, _ROWS)    # (2, 8), rows ordered (c major, k minor)
    b2 = b.reshape(C_OUT, 1)        # (2, 1)

    out = pl.pallas_call(
        conv1d_kernel,
        out_shape=jax.ShapeDtypeStruct((n, C_OUT, t_pad), jnp.float32),
        grid=(n, t_pad // tl),
        in_specs=[
            pl.BlockSpec((None, _ROWS, tl), lambda i, j: (i, 0, j)),  # im2col
            pl.BlockSpec(memory_space=pltpu.MemorySpace.VMEM),        # weights
            pl.BlockSpec(memory_space=pltpu.MemorySpace.VMEM),        # bias
        ],
        out_specs=pl.BlockSpec((None, C_OUT, tl), lambda i, j: (i, 0, j)),
        compiler_params=pltpu.CompilerParams(
            dimension_semantics=("parallel", "parallel")),
    )(x2, w2, b2)

    # Output is already (N, C_OUT, T); just drop the lane/block padding.
    return out[:, :, :l_out]


if __name__ == "__main__":
    key = jax.random.PRNGKey(0)
    kx, kw, kb = jax.random.split(key, 3)

    N, L = 2, 128                                 # output length = 8
    x = jax.random.normal(kx, (N, C_IN, L), dtype=jnp.float32)

    # Deterministic in-script init (PyTorch Conv1d default: U(-sqrt(k), sqrt(k)),
    # k = 1 / (C_in * kernel_size)).
    bound = 1.0 / float((C_IN * K) ** 0.5)
    w = jax.random.uniform(kw, (C_OUT, C_IN, K), minval=-bound, maxval=bound,
                           dtype=jnp.float32)
    b = jax.random.uniform(kb, (C_OUT,), minval=-bound, maxval=bound,
                           dtype=jnp.float32)

    out = jax.block_until_ready(embed_forward(x, w, b))

    # Reference check against XLA's conv (same NCW semantics as PyTorch).
    ref = jax.lax.conv_general_dilated(
        x, w, window_strides=(STRIDE,), padding=((PAD, PAD),),
        dimension_numbers=("NCH", "OIH", "NCH")) + b[None, :, None]

    l_out = (L + 2 * PAD - K) // STRIDE + 1
    assert out.shape == (N, C_OUT, l_out), out.shape
    assert jnp.allclose(out, ref, atol=1e-5, rtol=1e-5), \
        float(jnp.max(jnp.abs(out - ref)))
    print("KERNEL_OK")
</pallas_src>

<mosaic_0001>
module attributes {stable_mosaic.version = 11 : i64} {
  func.func @conv1d_kernel(%arg0: i32, %arg1: i32, %arg2: memref<1x8x128xf32, #tpu.memory_space<vmem>>, %arg3: memref<2x8xf32, #tpu.memory_space<vmem>>, %arg4: memref<2x1xf32, #tpu.memory_space<vmem>>, %arg5: memref<1x2x128xf32, #tpu.memory_space<vmem>>) attributes {dimension_semantics = [#tpu.dimension_semantics<parallel>, #tpu.dimension_semantics<parallel>], iteration_bounds = array<i64: 2, 1>, scalar_prefetch = 0 : i64, scratch_operands = 0 : i64, tpu.core_type = #tpu.core_type<tc>, window_params = [{transform_indices = @transform_0, window_bounds = array<i64: 1, 8, 128>}, {pipeline_mode = #tpu.pipeline_mode<synchronous>, transform_indices = @transform_1, window_bounds = array<i64: 2, 8>}, {pipeline_mode = #tpu.pipeline_mode<synchronous>, transform_indices = @transform_2, window_bounds = array<i64: 2, 1>}, {transform_indices = @transform_3, window_bounds = array<i64: 1, 2, 128>}]} {
    %c0 = arith.constant 0 : index
    %c0_0 = arith.constant 0 : index
    %0 = vector.load %arg3[%c0, %c0_0] : memref<2x8xf32, #tpu.memory_space<vmem>>, vector<2x8xf32>
    %c0_1 = arith.constant 0 : index
    %c0_2 = arith.constant 0 : index
    %c0_3 = arith.constant 0 : index
    %1 = vector.load %arg2[%c0_1, %c0_2, %c0_3] : memref<1x8x128xf32, #tpu.memory_space<vmem>>, vector<1x8x128xf32>
    %2 = vector.shape_cast %1 : vector<1x8x128xf32> to vector<8x128xf32>
    %cst = arith.constant dense<0.000000e+00> : vector<2x128xf32>
    %3 = tpu.matmul %0, %2, %cst {dimension_numbers = #tpu.dot_dimension_numbers<[1], [0], [0], [1], [0, 0, 1, 1], [], []>} : vector<2x8xf32>, vector<8x128xf32>, vector<2x128xf32> -> vector<2x128xf32>
    %c0_4 = arith.constant 0 : index
    %c0_5 = arith.constant 0 : index
    %4 = vector.load %arg4[%c0_4, %c0_5] : memref<2x1xf32, #tpu.memory_space<vmem>>, vector<2x1xf32>
    %5 = vector.broadcast %4 : vector<2x1xf32> to vector<2x128xf32>
    %6 = arith.addf %3, %5 : vector<2x128xf32>
    %c0_6 = arith.constant 0 : index
    %c0_7 = arith.constant 0 : index
    %c0_8 = arith.constant 0 : index
    %7 = vector.load %arg5[%c0_6, %c0_7, %c0_8] : memref<1x2x128xf32, #tpu.memory_space<vmem>>, vector<1x2x128xf32>
    %8 = vector.shape_cast %7 : vector<1x2x128xf32> to vector<2x128xf32>
    %9 = vector.shape_cast %6 : vector<2x128xf32> to vector<1x2x128xf32>
    tpu.vector_store %arg5[%c0_6, %c0_7, %c0_8], %9 {strides = array<i32>} : memref<1x2x128xf32, #tpu.memory_space<vmem>>, vector<1x2x128xf32>,
    return
  }
  func.func @transform_0(%arg0: i32, %arg1: i32) -> (i32, i32, i32) {
    %c0_i32 = arith.constant 0 : i32
    %c0_i32_0 = arith.constant 0 : i32
    return %arg0, %c0_i32, %arg1 : i32, i32, i32
  }
  func.func @transform_1(%arg0: i32, %arg1: i32) -> (i32, i32) {
    %c0_i32 = arith.constant 0 : i32
    %c0_i32_0 = arith.constant 0 : i32
    %c0_i32_1 = arith.constant 0 : i32
    return %c0_i32, %c0_i32_0 : i32, i32
  }
  func.func @transform_2(%arg0: i32, %arg1: i32) -> (i32, i32) {
    %c0_i32 = arith.constant 0 : i32
    %c0_i32_0 = arith.constant 0 : i32
    %c0_i32_1 = arith.constant 0 : i32
    return %c0_i32, %c0_i32_0 : i32, i32
  }
  func.func @transform_3(%arg0: i32, %arg1: i32) -> (i32, i32, i32) {
    %c0_i32 = arith.constant 0 : i32
    %c0_i32_0 = arith.constant 0 : i32
    return %arg0, %c0_i32, %arg1 : i32, i32, i32
  }
}

</mosaic_0001>

<llo_original>
// kernel: tpu_custom_call.1
$region0: #{tpu_custom_call.1}
  #allocation0 [shape = 'u32[]', space=smem, size = 0x4, offset = 0x4, fixed_abs, tag = 'smem constant byte address 0x4 - core index']
  #allocation1 [shape = 'u32[144,128]{1,0:T(1,128)}', space=vmem, size = 0x12000, scoped, tag = 'internal scratch']
  %s0 = inlined_call_operand.hbm [shape: f32[2,8,128], index: 0, kind: input, shape index: {}]
  %s1 = inlined_call_operand.vmem [shape: f32[2,8], index: 1, kind: input, shape index: {}]
  %s2 = inlined_call_operand.vmem [shape: f32[2,1], index: 2, kind: input, shape index: {}]
  %s3 = inlined_call_operand.hbm [shape: f32[2,2,128], index: 3, kind: output, shape index: {}]
  %s4 = sld [smem:[#allocation0]]
  $region49: #{tpu_custom_call.1} parent=0
    _
  %s6 = ssub.s32 1, %s4
  %s7 = scalar_select 0, %s6, %s4
  $region1: #{tpu_custom_call.1} parent=0
    #allocation2 [shape = 'u8[8192]{0}', space=vmem, size = 0x2000, scoped, tag = 'input window, operand 0']
    #allocation3 [shape = 's32[2]{0}', space=sflag, size = 0x8, scoped, tag = 'scoped memory for tpu_custom_call.1']
    #allocation4 [shape = 's32[2]{0}', space=sflag, size = 0x8, scoped, tag = 'scoped memory for tpu_custom_call.1']
    #allocation5 [shape = 'u8[2048]{0}', space=vmem, size = 0x800, scoped, tag = 'output window, operand 0']
    %8 = vsyncpa [#allocation3], 0
    %s9 = scalar_lea.sflag [#allocation3], 1
    %10 = vsyncpa %s9, 0
    %11 = vsyncpa [#allocation4], 0
    %s12 = scalar_lea.sflag [#allocation4], 1
    %13 = vsyncpa %s12, 0
    loop: start=0, step=1, limit=4
    $region2: #{tpu_custom_call.1} parent=1 // loop_pre_header
      _
    $region3: #{tpu_custom_call.1} parent=1 // loop_header
      %s15 = sphi 0, %s19
      %p16 = scmp.ge.s32.totalorder %s15, 4
      %s22 = sphi 0, %s34
      %s23 = sphi 0, %s30
      %s24 = sphi 0, %s22
      %s25 = sphi 0, %s23
      %s26 = sphi 0, %s24
      %s27 = sphi 0, %s25
      %s39 = sphi 0, %s41
      %s42 = sphi 0, %s39
      %s43 = sphi 0, %s42
      %s59 = sphi 0, %s43
      %s63 = sphi 0, %s63
      %s65 = sphi 0, %s63
      %s66 = sphi 0, %s65
      %s80 = sphi 0, %s66
      %s84 = sphi 0, %s84
      %s86 = sphi 0, %s84
      %s87 = sphi 0, %s86
      %s101 = sphi 0, %s87
      %s109 = sphi 0, %s111
      %s112 = sphi 0, %s109
      %s113 = sphi 0, %s112
      %s129 = sphi 0, %s113
    $region4: #{tpu_custom_call.1} parent=1 // loop_header_branch
      %18 = sbr.rel (%p16) target = $region8
    $region5: #{tpu_custom_call.1} parent=1 // loop_body
      %s20 = ssub.s32 %s15, 1
      %s21 = ssub.s32 %s15, 2
      %s28 = sadd.s32 1, %s23
      %p29 = scmp.ge.s32.totalorder %s28, 1
      %s30 = scalar_select %p29, 0, %s28
      %s31 = sadd.s32 1, %s22
      %s32 = scalar_select %p29, %s31, %s22
      %p33 = scmp.ge.s32.totalorder %s32, 2
      %s34 = scalar_select %p33, 0, %s32
      %s35 = ssub.s32 %s22, %s34
      %s36 = ssub.s32 %s23, %s30
      %s37 = sor.u32 %s35, %s36
      %p38 = scmp.eq.s32.totalorder %s37, 0
      %s40 = sadd.s32 %s39, 1
      %s41 = scalar_select %p38, %s39, %s40
      %p44 = pneg %p38
      %p45 = scmp.eq.s32.totalorder %s15, 1
      %p46 = por %p44, %p45
      %p47 = scmp.ne.s32.totalorder %s39, %s42
      %p48 = scmp.eq.s32.totalorder %s15, 0
      %p49 = por %p47, %p48
      %p50 = scmp.ne.s32.totalorder %s39, %s42
      %p51 = scmp.eq.s32.totalorder %s20, 1
      %p52 = por %p50, %p51
      %p53 = scmp.ne.s32.totalorder %s42, %s43
      %p54 = scmp.eq.s32.totalorder %s20, 0
      %p55 = por %p53, %p54
      %p56 = scmp.ne.s32.totalorder %s42, %s43
      %p57 = scmp.eq.s32.totalorder %s21, 1
      %p58 = por %p56, %p57
      %p60 = scmp.ne.s32.totalorder %s43, %s59
      %p61 = scmp.eq.s32.totalorder %s21, 0
      %p62 = por %p60, %p61
      %s64 = sadd.s32 %s63, 1
      %p67 = scmp.eq.s32.totalorder %s15, 1
      %p68 = scmp.ne.s32.totalorder %s63, %s65
      %p69 = scmp.eq.s32.totalorder %s15, 0
      %p70 = por %p68, %p69
      %p71 = scmp.ne.s32.totalorder %s63, %s65
      %p72 = scmp.eq.s32.totalorder %s20, 1
      %p73 = por %p71, %p72
      %p74 = scmp.ne.s32.totalorder %s65, %s66
      %p75 = scmp.eq.s32.totalorder %s20, 0
      %p76 = por %p74, %p75
      %p77 = scmp.ne.s32.totalorder %s65, %s66
      %p78 = scmp.eq.s32.totalorder %s21, 1
      %p79 = por %p77, %p78
      %p81 = scmp.ne.s32.totalorder %s66, %s80
      %p82 = scmp.eq.s32.totalorder %s21, 0
      %p83 = por %p81, %p82
      %s85 = sadd.s32 %s84, 1
      %p88 = scmp.eq.s32.totalorder %s15, 1
      %p89 = scmp.ne.s32.totalorder %s84, %s86
      %p90 = scmp.eq.s32.totalorder %s15, 0
      %p91 = por %p89, %p90
      %p92 = scmp.ne.s32.totalorder %s84, %s86
      %p93 = scmp.eq.s32.totalorder %s20, 1
      %p94 = por %p92, %p93
      %p95 = scmp.ne.s32.totalorder %s86, %s87
      %p96 = scmp.eq.s32.totalorder %s20, 0
      %p97 = por %p95, %p96
      %p98 = scmp.ne.s32.totalorder %s86, %s87
      %p99 = scmp.eq.s32.totalorder %s21, 1
      %p100 = por %p98, %p99
      %p102 = scmp.ne.s32.totalorder %s87, %s101
      %p103 = scmp.eq.s32.totalorder %s21, 0
      %p104 = por %p102, %p103
      %s105 = ssub.s32 %s22, %s34
      %s106 = ssub.s32 %s23, %s30
      %s107 = sor.u32 %s105, %s106
      %p108 = scmp.eq.s32.totalorder %s107, 0
      %s110 = sadd.s32 %s109, 1
      %s111 = scalar_select %p108, %s109, %s110
      %p114 = pneg %p108
      %p115 = scmp.eq.s32.totalorder %s15, 1
      %p116 = por %p114, %p115
      %p117 = scmp.ne.s32.totalorder %s109, %s112
      %p118 = scmp.eq.s32.totalorder %s15, 0
      %p119 = por %p117, %p118
      %p120 = scmp.ne.s32.totalorder %s109, %s112
      %p121 = scmp.eq.s32.totalorder %s20, 1
      %p122 = por %p120, %p121
      %p123 = scmp.ne.s32.totalorder %s112, %s113
      %p124 = scmp.eq.s32.totalorder %s20, 0
      %p125 = por %p123, %p124
      %p126 = scmp.ne.s32.totalorder %s112, %s113
      %p127 = scmp.eq.s32.totalorder %s21, 1
      %p128 = por %p126, %p127
      %p130 = scmp.ne.s32.totalorder %s113, %s129
      %p131 = scmp.eq.s32.totalorder %s21, 0
      %p132 = por %p130, %p131
      %p133 = scmp.le.s32.totalorder 1, %s15
      %p134 = scmp.lt.s32.totalorder %s15, 3
      %p135 = pnand %p133, %p134
      %p136 = pneg %p135
      // Predicated region
      $region9: #{tpu_custom_call.1} parent=5 // pred_check
        _
      $region10: #{tpu_custom_call.1} parent=5 // pred_check_branch
        %138 = sbr.rel (%p135) target = $region12
      $region11: #{tpu_custom_call.1} parent=5 // pred_region
        %s139 = ssub.s32 %s15, 1
        // Predicated region
        $region13: #{tpu_custom_call.1} parent=11 // pred_check
          %p140 = pneg %p76
        $region14: #{tpu_custom_call.1} parent=11 // pred_check_branch
          %142 = sbr.rel (%p140) target = $region16
        $region15: #{tpu_custom_call.1} parent=11 // pred_region
          _
        $region16: #{tpu_custom_call.1} parent=11 // pred_fallthru
          _
        // Predicated region
        $region17: #{tpu_custom_call.1} parent=11 // pred_check
          %p143 = pneg %p97
        $region18: #{tpu_custom_call.1} parent=11 // pred_check_branch
          %145 = sbr.rel (%p143) target = $region20
        $region19: #{tpu_custom_call.1} parent=11 // pred_region
          _
        $region20: #{tpu_custom_call.1} parent=11 // pred_fallthru
          _
      $region12: #{tpu_custom_call.1} parent=5 // pred_fallthru
        _
      %p146 = scmp.lt.s32.totalorder %s15, 2
      // Predicated region
      $region21: #{tpu_custom_call.1} parent=5 // pred_check
        %p147 = pneg %p146
      $region22: #{tpu_custom_call.1} parent=5 // pred_check_branch
        %149 = sbr.rel (%p147) target = $region24
      $region23: #{tpu_custom_call.1} parent=5 // pred_region
        // Predicated region
        $region25: #{tpu_custom_call.1} parent=23 // pred_check
          %p150 = pneg %p49
        $region26: #{tpu_custom_call.1} parent=23 // pred_check_branch
          %152 = sbr.rel (%p150) target = $region28
        $region27: #{tpu_custom_call.1} parent=23 // pred_region
          %s153 = sand.u32 %s39, 1
          %s154 = scalar_lea.sflag [#allocation3], %s153
          %s155 = sand.u32 %s39, 1
          %s156 = smul.addr %s155, 8
          %s157 = scalar_lea.vmem [#allocation2], %s156
          %s159 = ssub.s32 128, 128
          %160 = vsyncadd %s154, %s159
          %s161 = sadd.s32 %s23, %s22
          %s162 = smul.addr %s161, 128
          %s163 = scalar_lea.hbm %s0, %s162
          %s165 = sshll.u32 %s157, 4
          %s166 = int_to_ptr.vmem [resolvable:$true] %s165
          %168 = dma.hbm_to_vmem [thread:$0]  %s163, 128, %s166, %s154
        $region28: #{tpu_custom_call.1} parent=23 // pred_fallthru
          _
      $region24: #{tpu_custom_call.1} parent=5 // pred_fallthru
        _
      %p169 = scmp.le.s32.totalorder 1, %s15
      %p170 = scmp.lt.s32.totalorder %s15, 3
      %p171 = pnand %p169, %p170
      %p172 = pneg %p171
      // Predicated region
      $region29: #{tpu_custom_call.1} parent=5 // pred_check
        _
      $region30: #{tpu_custom_call.1} parent=5 // pred_check_branch
        %174 = sbr.rel (%p171) target = $region32
      $region31: #{tpu_custom_call.1} parent=5 // pred_region
        %s175 = ssub.s32 %s15, 1
        %s176 = sand.u32 %s42, 1
        %s177 = scalar_lea.sflag [#allocation3], %s176
        %s178 = sand.u32 %s42, 1
        %s179 = smul.addr %s178, 8
        %s180 = scalar_lea.vmem [#allocation2], %s179
        // Predicated region
        $region33: #{tpu_custom_call.1} parent=31 // pred_check
          %p181 = pneg %p55
        $region34: #{tpu_custom_call.1} parent=31 // pred_check_branch
          %183 = sbr.rel (%p181) target = $region36
        $region35: #{tpu_custom_call.1} parent=31 // pred_region
          %184 = dma.done %s177, 128
        $region36: #{tpu_custom_call.1} parent=31 // pred_fallthru
          _
        %s185 = sand.u32 %s42, 1
        %s186 = scalar_lea.sflag [#allocation3], %s185
        %s187 = sand.u32 %s42, 1
        %s188 = smul.addr %s187, 8
        %s189 = scalar_lea.vmem [#allocation2], %s188
        %p190 = pneg %p55
        %p191 = pneg %p52
        %p192 = pneg %p76
        %p193 = pneg %p73
        %p194 = pneg %p97
        %p195 = pneg %p94
        %p196 = pneg %p125
        %p197 = pneg %p122
        %s198 = sand.u32 %s112, 1
        %s199 = scalar_lea.sflag [#allocation4], %s198
        %s200 = sand.u32 %s112, 1
        %s201 = smul.addr %s200, 2
        %s202 = scalar_lea.vmem [#allocation5], %s201
        %v203 = vld [vmem:[%s1] sm:$0x3]
        %v204 = vld [vmem:[%s180] sm:$0xff]
        %v205 = vld [vmem:[%s2] sm:$0x3]
        %207 = vset.pattern.permute.xlu0 0
        %208 = vperm.xlu0 %207, %v205
        %v209 = vpop.permute.xlu0 %208
        %vm211 = vcmask 64512
        %v213 = vsel %vm211, %v203, 0
        %215 = vmatprep.subr.mxu0 0.0
        %216 = vmatpush1.msra.mxu0 %v204
        %217 = vmatprep.subr.mxu0 0.0
        %218 = vmatpush1.msra.mxu0 0.0
        %219 = vmatprep.subr.mxu0 0.0
        %220 = vmatpush1.msra.mxu0 0.0
        %221 = vmatprep.subr.mxu0 0.0
        %222 = vmatpush1.msra.mxu0 0.0
        %223 = vmatprep.subr.mxu0 0.0
        %224 = vmatpush1.msra.mxu0 0.0
        %225 = vmatprep.subr.mxu0 0.0
        %226 = vmatpush1.msra.mxu0 0.0
        %227 = vmatprep.subr.mxu0 0.0
        %228 = vmatpush1.msra.mxu0 0.0
        %229 = vmatprep.subr.mxu0 0.0
        %230 = vmatpush1.msra.mxu0 0.0
        %231 = vmatprep.subr.mxu0 0.0
        %232 = vmatpush1.msra.mxu0 0.0
        %233 = vmatprep.subr.mxu0 0.0
        %234 = vmatpush1.msra.mxu0 0.0
        %235 = vmatprep.subr.mxu0 0.0
        %236 = vmatpush1.msra.mxu0 0.0
        %237 = vmatprep.subr.mxu0 0.0
        %238 = vmatpush1.msra.mxu0 0.0
        %239 = vmatprep.subr.mxu0 0.0
        %240 = vmatpush1.msra.mxu0 0.0
        %241 = vmatprep.subr.mxu0 0.0
        %242 = vmatpush1.msra.mxu0 0.0
        %243 = vmatprep.subr.mxu0 0.0
        %244 = vmatpush1.msra.mxu0 0.0
        %245 = vmatprep.subr.mxu0 0.0
        %246 = vmatpush1.msra.mxu0 0.0
        %247 = vmatprep.subr.mxu0 0.0
        %248 = vmatpush1.msra.mxu0 0.0
        %249 = vmatprep.subr.mxu0 0.0
        %250 = vmatpush1.msra.mxu0 0.0
        %251 = vmatprep.subr.mxu0 0.0
        %252 = vmatpush1.msra.mxu0 0.0
        %253 = vmatprep.subr.mxu0 0.0
        %254 = vmatpush1.msra.mxu0 0.0
        %255 = vmatprep.subr.mxu0 0.0
        %256 = vmatpush1.msra.mxu0 0.0
        %257 = vmatprep.subr.mxu0 0.0
        %258 = vmatpush1.msra.mxu0 0.0
        %259 = vmatprep.subr.mxu0 0.0
        %260 = vmatpush1.msra.mxu0 0.0
        %261 = vmatprep.subr.mxu0 0.0
        %262 = vmatpush1.msra.mxu0 0.0
        %263 = vmatprep.subr.mxu0 0.0
        %264 = vmatpush1.msra.mxu0 0.0
        %265 = vmatprep.subr.mxu0 0.0
        %266 = vmatpush1.msra.mxu0 0.0
        %267 = vmatprep.subr.mxu0 0.0
        %268 = vmatpush1.msra.mxu0 0.0
        %269 = vmatprep.subr.mxu0 0.0
        %270 = vmatpush1.msra.mxu0 0.0
        %271 = vmatprep.subr.mxu0 0.0
        %272 = vmatpush1.msra.mxu0 0.0
        %273 = vmatprep.subr.mxu0 0.0
        %274 = vmatpush1.msra.mxu0 0.0
        %275 = vmatprep.subr.mxu0 0.0
        %276 = vmatpush1.msra.mxu0 0.0
        %277 = vmatprep.subr.mxu0 0.0
        %278 = vmatpush1.msra.mxu0 0.0
        %279 = vmatprep.mubr.f32.mxu0 0.0
        %280 = vmatmul.mubr.f32.gmra.mrb[0].mxu0 %v213
        %v281 = vpop.f32.mrb[0].mxu0
        %v282 = vadd.f32 %v209, %v281
        %v283 = vpop.f32.mrb[0].mxu0
        %284 = vdwg.mxu0
        %285 = vst [vmem:[%s202] sm:$0x3] %v282
        %s286 = sand.u32 %s112, 1
        %s287 = scalar_lea.sflag [#allocation4], %s286
        %s288 = sand.u32 %s112, 1
        %s289 = smul.addr %s288, 2
        %s290 = scalar_lea.vmem [#allocation5], %s289
        // Predicated region
        $region37: #{tpu_custom_call.1} parent=31 // pred_check
          %p291 = pneg %p122
        $region38: #{tpu_custom_call.1} parent=31 // pred_check_branch
          %293 = sbr.rel (%p291) target = $region40
        $region39: #{tpu_custom_call.1} parent=31 // pred_region
          %s295 = ssub.s32 32, 32
          %296 = vsyncadd %s287, %s295
          %s297 = sadd.s32 %s25, %s24
          %s298 = smul.addr %s297, 32
          %s299 = scalar_lea.hbm %s3, %s298
          %s301 = sshll.u32 %s290, 4
          %s302 = int_to_ptr.vmem [resolvable:$true] %s301
          %304 = dma.vmem_to_hbm [thread:$0]  %s302, 32, %s299, %s287
        $region40: #{tpu_custom_call.1} parent=31 // pred_fallthru
          _
      $region32: #{tpu_custom_call.1} parent=5 // pred_fallthru
        _
      %p305 = scmp.le.s32.totalorder 2, %s15
      // Predicated region
      $region41: #{tpu_custom_call.1} parent=5 // pred_check
        %p306 = pneg %p305
      $region42: #{tpu_custom_call.1} parent=5 // pred_check_branch
        %308 = sbr.rel (%p306) target = $region44
      $region43: #{tpu_custom_call.1} parent=5 // pred_region
        %s309 = ssub.s32 %s15, 2
        // Predicated region
        $region45: #{tpu_custom_call.1} parent=43 // pred_check
          %p310 = pneg %p128
        $region46: #{tpu_custom_call.1} parent=43 // pred_check_branch
          %312 = sbr.rel (%p310) target = $region48
        $region47: #{tpu_custom_call.1} parent=43 // pred_region
          %s313 = sand.u32 %s113, 1
          %s314 = scalar_lea.sflag [#allocation4], %s313
          %s315 = sand.u32 %s113, 1
          %s316 = smul.addr %s315, 2
          %s317 = scalar_lea.vmem [#allocation5], %s316
          %318 = dma.done %s314, 32
        $region48: #{tpu_custom_call.1} parent=43 // pred_fallthru
          _
      $region44: #{tpu_custom_call.1} parent=5 // pred_fallthru
        _
    $region6: #{tpu_custom_call.1} parent=1 // loop_footer
      %s19 = sadd.s32 1, %s15
    $region7: #{tpu_custom_call.1} parent=1 // loop_footer_branch
      %14 = sbr.rel target = $region3
    $region8: #{tpu_custom_call.1} parent=1 // loop_exit
      _
    %319 = vsyncpa [#allocation3], 1
    %s320 = scalar_lea.sflag [#allocation3], 1
    %321 = vsyncpa %s320, 1
    %322 = vsyncpa [#allocation4], 1
    %s323 = scalar_lea.sflag [#allocation4], 1
    %324 = vsyncpa %s323, 1

</llo_original>
